<compile_context>
chip_gen: v7x
topology: tpu7x:2x2x1
jax: 0.10.0
libtpu: 0.0.40
codegen_flags: <defaults>
</compile_context>

<pallas_src>
import functools
import math

import jax
import jax.numpy as jnp
from jax.experimental import pallas as pl
from jax.experimental.pallas import tpu as pltpu

_IN_DIM = 192
_FEAT_DIM = 128
_OUT_DIM = 10
_EMO_DIM = 5
_HEADS_DIM = _OUT_DIM + _EMO_DIM          # 15
_ALL_DIM = _FEAT_DIM + _HEADS_DIM         # 143

_MAX_TILE_B = 2048                        # cap: keeps double-buffered VMEM tiny
_MIN_TILE_B = 256                         # don't tile below this (step overhead ~0.35us)
_PALLAS_MIN_BATCH = 128                   # below this, XLA fallback beats kernel launch


def _speaker_kernel(x_ref, w_ref, b_ref, feat_ref, heads_ref, *, feat_dim):
    """Single fused matmul: y = x @ [A_feat | A_feat@A_heads] + [b_feat | ...]."""
    y = jnp.dot(x_ref[...], w_ref[...], preferred_element_type=jnp.float32)
    y = y + b_ref[...]
    # Slice at 128 is lane-granule aligned; heads slice (15 wide) is a small masked store.
    feat_ref[...] = y[:, :feat_dim].astype(feat_ref.dtype)
    heads_ref[...] = y[:, feat_dim:].astype(heads_ref.dtype)


def prepare_speaker_params(params):
    """Collapse the nine affine layers into ONE (done once, outside the hot path).

    params[name] = (W, b) with W shaped (out_features, in_features), as in nn.Linear.
    """
    w1, b1 = params["fc1"]
    we, be = params["fc_embed"]
    wf, bf = params["fc"]
    w2, b2 = params["fc2"]
    we1, be1 = params["fc_embed_1"]
    w3, b3 = params["fc3"]
    w4, b4 = params["fc4"]
    we2, be2 = params["fc_embed_2"]
    w5, b5 = params["fc5"]

    # feat = ((x @ W1^T + b1) @ We^T + be) @ Wf^T + bf
    a_feat = w1.T @ we.T @ wf.T                       # (192, 128)
    b_feat = (b1 @ we.T + be) @ wf.T + bf             # (128,)

    # out = ((feat @ W2^T + b2) @ We1^T + be1) @ W3^T + b3
    a_out = w2.T @ we1.T @ w3.T                       # (128, 10)
    b_out = (b2 @ we1.T + be1) @ w3.T + b3            # (10,)

    # emo = ((feat @ W4^T + b4) @ We2^T + be2) @ W5^T + b5
    a_emo = w4.T @ we2.T @ w5.T                       # (128, 5)
    b_emo = (b4 @ we2.T + be2) @ w5.T + b5            # (5,)

    a_heads = jnp.concatenate([a_out, a_emo], axis=1)             # (128, 15)
    b_heads = jnp.concatenate([b_out, b_emo], axis=0)             # (15,)

    # Fold the head matmul through the feature matmul -> one MXU pass total.
    a_all = jnp.concatenate([a_feat, a_feat @ a_heads], axis=1)            # (192, 143)
    b_all = jnp.concatenate([b_feat, b_feat @ a_heads + b_heads], axis=0)  # (143,)

    return {
        "a_all": jnp.asarray(a_all, jnp.float32),
        "b_all": jnp.asarray(b_all, jnp.float32).reshape(1, -1),
    }


def _choose_tile_b(batch):
    """Batch tile: single block for small B; >=4 steps (2 per TC on v7x) when large."""
    if batch <= _MIN_TILE_B:
        return batch
    tile = max(_MIN_TILE_B, min(_MAX_TILE_B, pl.cdiv(batch, 4)))
    tile = -(-tile // 8) * 8              # multiple of 8 for the (8, 128) tiling rule
    return min(tile, batch)


def speaker_model_forward(x, prepared, alpha=1.0, *, force_pallas=False):
    """Fused forward pass. Returns (out, emo_out, feat) like the PyTorch module."""
    # TODO(synk): alpha / ReverseLayerF only affects the backward pass (gradient
    # reversal); the forward is the identity, so alpha is unused here.
    del alpha

    B, in_dim = x.shape
    a_all = prepared["a_all"]
    b_all = prepared["b_all"]
    all_dim = a_all.shape[1]
    feat_dim = _FEAT_DIM

    if B < _PALLAS_MIN_BATCH and not force_pallas:
        # At tiny B the forward is <1 MFLOP; pallas_call launch latency dominates.
        y = x.astype(jnp.float32) @ a_all + b_all
        feat = y[:, :feat_dim]
        return y[:, feat_dim:feat_dim + _OUT_DIM], y[:, feat_dim + _OUT_DIM:], feat

    tile_b = _choose_tile_b(B)
    grid = (pl.cdiv(B, tile_b),)
    kernel = functools.partial(_speaker_kernel, feat_dim=feat_dim)

    feat, heads = pl.pallas_call(
        kernel,
        out_shape=(
            jax.ShapeDtypeStruct((B, feat_dim), jnp.float32),    # feat
            jax.ShapeDtypeStruct((B, _HEADS_DIM), jnp.float32),  # [out | emo]
        ),
        grid_spec=pltpu.PrefetchScalarGridSpec(
            num_scalar_prefetch=0,
            grid=grid,
            in_specs=[
                pl.BlockSpec((tile_b, in_dim), lambda i: (i, 0)),     # x tile
                pl.BlockSpec((in_dim, all_dim), lambda i: (0, 0)),    # A_all (resident)
                pl.BlockSpec((1, all_dim), lambda i: (0, 0)),         # b_all (resident)
            ],
            out_specs=[
                pl.BlockSpec((tile_b, feat_dim), lambda i: (i, 0)),
                pl.BlockSpec((tile_b, _HEADS_DIM), lambda i: (i, 0)),
            ],
        ),
        compiler_params=pltpu.CompilerParams(
            dimension_semantics=("parallel",),
        ),
    )(x, a_all, b_all)

    out = heads[:, :_OUT_DIM]
    emo_out = heads[:, _OUT_DIM:]
    return out, emo_out, feat


def _init_linear(key, in_features, out_features):
    """Deterministic init mimicking nn.Linear defaults (uniform +/- 1/sqrt(fan_in))."""
    kw, kb = jax.random.split(key)
    bound = 1.0 / math.sqrt(in_features)
    w = jax.random.uniform(kw, (out_features, in_features), jnp.float32, -bound, bound)
    b = jax.random.uniform(kb, (out_features,), jnp.float32, -bound, bound)
    return w, b


def init_speaker_model_params(key):
    shapes = {
        "fc1": (192, 128),
        "fc": (128, 128),
        "fc_embed": (128, 128),
        "fc2": (128, 128),
        "fc_embed_1": (128, 128),
        "fc3": (128, 10),
        "fc4": (128, 128),
        "fc_embed_2": (128, 128),
        "fc5": (128, 5),
    }
    params = {}
    keys = jax.random.split(key, len(shapes))
    for k, (name, (fin, fout)) in zip(keys, sorted(shapes.items())):
        params[name] = _init_linear(k, fin, fout)
    return params


def _reference_forward(x, params):
    """Plain-JAX reference using the ORIGINAL (uncollapsed) layers."""
    def lin(name, h):
        w, b = params[name]
        return h @ w.T + b

    feat = lin("fc", lin("fc_embed", lin("fc1", x)))
    out = lin("fc3", lin("fc_embed_1", lin("fc2", feat)))
    emo = lin("fc5", lin("fc_embed_2", lin("fc4", feat)))
    return out, emo, feat


def _check(x, params, prepared, force_pallas):
    out, emo_out, feat = speaker_model_forward(x, prepared, alpha=1.0,
                                               force_pallas=force_pallas)
    jax.block_until_ready((out, emo_out, feat))
    ro, re, rf = _reference_forward(x, params)
    B = x.shape[0]
    assert out.shape == (B, 10) and emo_out.shape == (B, 5) and feat.shape == (B, 128)
    assert jnp.allclose(out, ro, atol=1e-4, rtol=1e-4)
    assert jnp.allclose(emo_out, re, atol=1e-4, rtol=1e-4)
    assert jnp.allclose(feat, rf, atol=1e-4, rtol=1e-4)


if __name__ == "__main__":
    key = jax.random.PRNGKey(0)
    k_params, k_x_small, k_x_big = jax.random.split(key, 3)

    params = init_speaker_model_params(k_params)
    prepared = prepare_speaker_params(params)            # one-time collapse

    # Small batch (B=8): force the Pallas path to validate the kernel itself.
    x_small = jax.random.normal(k_x_small, (8, _IN_DIM), dtype=jnp.float32)
    _check(x_small, params, prepared, force_pallas=True)

    # Larger batch (B=1024): exercises the 4-step parallel grid (2 steps/TC on v7x).
    x_big = jax.random.normal(k_x_big, (1024, _IN_DIM), dtype=jnp.float32)
    _check(x_big, params, prepared, force_pallas=False)

    print("KERNEL_OK")
</pallas_src>

<mosaic_0001>
module attributes {stable_mosaic.version = 11 : i64} {
  func.func @_speaker_kernel(%arg0: i32, %arg1: memref<8x192xf32, #tpu.memory_space<vmem>>, %arg2: memref<192x143xf32, #tpu.memory_space<vmem>>, %arg3: memref<1x143xf32, #tpu.memory_space<vmem>>, %arg4: memref<8x128xf32, #tpu.memory_space<vmem>>, %arg5: memref<8x15xf32, #tpu.memory_space<vmem>>) attributes {dimension_semantics = [#tpu.dimension_semantics<parallel>], iteration_bounds = array<i64: 1>, scalar_prefetch = 0 : i64, scratch_operands = 0 : i64, tpu.core_type = #tpu.core_type<tc>, window_params = [{transform_indices = @transform_0, window_bounds = array<i64: 8, 192>}, {pipeline_mode = #tpu.pipeline_mode<synchronous>, transform_indices = @transform_1, window_bounds = array<i64: 192, 143>}, {pipeline_mode = #tpu.pipeline_mode<synchronous>, transform_indices = @transform_2, window_bounds = array<i64: 1, 143>}, {transform_indices = @transform_3, window_bounds = array<i64: 8, 128>}, {transform_indices = @transform_4, window_bounds = array<i64: 8, 15>}]} {
    %c0 = arith.constant 0 : index
    %c0_0 = arith.constant 0 : index
    %0 = vector.load %arg1[%c0, %c0_0] : memref<8x192xf32, #tpu.memory_space<vmem>>, vector<8x192xf32>
    %c0_1 = arith.constant 0 : index
    %c0_2 = arith.constant 0 : index
    %1 = vector.load %arg2[%c0_1, %c0_2] : memref<192x143xf32, #tpu.memory_space<vmem>>, vector<192x143xf32>
    %cst = arith.constant dense<0.000000e+00> : vector<8x143xf32>
    %2 = tpu.matmul %0, %1, %cst {dimension_numbers = #tpu.dot_dimension_numbers<[1], [0], [0], [1], [0, 0, 1, 1], [], []>} : vector<8x192xf32>, vector<192x143xf32>, vector<8x143xf32> -> vector<8x143xf32>
    %c0_3 = arith.constant 0 : index
    %c0_4 = arith.constant 0 : index
    %3 = vector.load %arg3[%c0_3, %c0_4] : memref<1x143xf32, #tpu.memory_space<vmem>>, vector<1x143xf32>
    %4 = vector.broadcast %3 : vector<1x143xf32> to vector<8x143xf32>
    %5 = arith.addf %2, %4 : vector<8x143xf32>
    %6 = vector.extract_strided_slice %5 {offsets = [0, 0], sizes = [8, 128], strides = [1, 1]} : vector<8x143xf32> to vector<8x128xf32>
    %c0_5 = arith.constant 0 : index
    %c0_6 = arith.constant 0 : index
    %7 = vector.load %arg4[%c0_5, %c0_6] : memref<8x128xf32, #tpu.memory_space<vmem>>, vector<8x128xf32>
    tpu.vector_store %arg4[%c0_5, %c0_6], %6 {strides = array<i32>} : memref<8x128xf32, #tpu.memory_space<vmem>>, vector<8x128xf32>,
    %8 = vector.extract_strided_slice %5 {offsets = [0, 128], sizes = [8, 15], strides = [1, 1]} : vector<8x143xf32> to vector<8x15xf32>
    %c0_7 = arith.constant 0 : index
    %c0_8 = arith.constant 0 : index
    %9 = vector.load %arg5[%c0_7, %c0_8] : memref<8x15xf32, #tpu.memory_space<vmem>>, vector<8x15xf32>
    tpu.vector_store %arg5[%c0_7, %c0_8], %8 {strides = array<i32>} : memref<8x15xf32, #tpu.memory_space<vmem>>, vector<8x15xf32>,
    return
  }
  func.func @transform_0(%arg0: i32) -> (i32, i32) {
    %c0_i32 = arith.constant 0 : i32
    %c0_i32_0 = arith.constant 0 : i32
    return %arg0, %c0_i32 : i32, i32
  }
  func.func @transform_1(%arg0: i32) -> (i32, i32) {
    %c0_i32 = arith.constant 0 : i32
    %c0_i32_0 = arith.constant 0 : i32
    %c0_i32_1 = arith.constant 0 : i32
    return %c0_i32, %c0_i32_0 : i32, i32
  }
  func.func @transform_2(%arg0: i32) -> (i32, i32) {
    %c0_i32 = arith.constant 0 : i32
    %c0_i32_0 = arith.constant 0 : i32
    %c0_i32_1 = arith.constant 0 : i32
    return %c0_i32, %c0_i32_0 : i32, i32
  }
  func.func @transform_3(%arg0: i32) -> (i32, i32) {
    %c0_i32 = arith.constant 0 : i32
    %c0_i32_0 = arith.constant 0 : i32
    return %arg0, %c0_i32 : i32, i32
  }
  func.func @transform_4(%arg0: i32) -> (i32, i32) {
    %c0_i32 = arith.constant 0 : i32
    %c0_i32_0 = arith.constant 0 : i32
    return %arg0, %c0_i32 : i32, i32
  }
}

</mosaic_0001>

<llo_original>
// kernel: tpu_custom_call.1
$region0: #{tpu_custom_call.1}
  #allocation0 [shape = 'u32[]', space=smem, size = 0x4, offset = 0x4, fixed_abs, tag = 'smem constant byte address 0x4 - core index']
  #allocation1 [shape = 'u32[144,128]{1,0:T(1,128)}', space=vmem, size = 0x12000, scoped, tag = 'internal scratch']
  %s0 = inlined_call_operand.vmem [shape: f32[8,192], index: 0, kind: input, shape index: {}]
  %s1 = inlined_call_operand.vmem [shape: f32[192,143], index: 1, kind: input, shape index: {}]
  %s2 = inlined_call_operand.vmem [shape: f32[1,143], index: 2, kind: input, shape index: {}]
  %s3 = inlined_call_operand.hbm [shape: f32[8,128], index: 3, kind: output, shape index: {0}]
  %s4 = inlined_call_operand.hbm [shape: f32[8,15], index: 4, kind: output, shape index: {1}]
  %5 = xla_tuple %s3, %s4
  %s6 = sld [smem:[#allocation0]]
  $region30: #{tpu_custom_call.1} parent=0
    _
  %s8 = ssub.s32 1, %s6
  %s9 = scalar_select 0, %s8, %s6
  $region1: #{tpu_custom_call.1} parent=0
    #allocation2 [shape = 'u8[4096]{0}', space=vmem, size = 0x1000, scoped, tag = 'output window, operand 0, single buffered']
    #allocation3 [shape = 's32[1]{0}', space=sflag, size = 0x4, scoped, tag = 'scoped memory for tpu_custom_call.1']
    #allocation4 [shape = 'u8[4096]{0}', space=vmem, size = 0x1000, scoped, tag = 'output window, operand 1, single buffered']
    #allocation5 [shape = 's32[1]{0}', space=sflag, size = 0x4, scoped, tag = 'scoped memory for tpu_custom_call.1']
    %10 = vsyncpa [#allocation3], 0
    %11 = vsyncpa [#allocation5], 0
    // Predicated region
    $region2: #{tpu_custom_call.1} parent=1 // pred_check
      _
    $region3: #{tpu_custom_call.1} parent=1 // pred_check_branch
      %13 = sbr.rel (0) target = $region5
    $region4: #{tpu_custom_call.1} parent=1 // pred_region
      _
    $region5: #{tpu_custom_call.1} parent=1 // pred_fallthru
      _
    // Predicated region
    $region6: #{tpu_custom_call.1} parent=1 // pred_check
      _
    $region7: #{tpu_custom_call.1} parent=1 // pred_check_branch
      %15 = sbr.rel (0) target = $region9
    $region8: #{tpu_custom_call.1} parent=1 // pred_region
      _
    $region9: #{tpu_custom_call.1} parent=1 // pred_fallthru
      _
    // Predicated region
    $region10: #{tpu_custom_call.1} parent=1 // pred_check
      _
    $region11: #{tpu_custom_call.1} parent=1 // pred_check_branch
      %17 = sbr.rel (0) target = $region13
    $region12: #{tpu_custom_call.1} parent=1 // pred_region
      _
    $region13: #{tpu_custom_call.1} parent=1 // pred_fallthru
      _
    %v18 = vld [vmem:[%s0] sm:$0xff]
    %v19 = vld [vmem:[%s0 + $0x8] sm:$0xff]
    %v20 = vld [vmem:[%s1] sm:$0xff]
    %v21 = vld [vmem:[%s1 + $0x8] sm:$0xff]
    %v22 = vld [vmem:[%s1 + $0x10] sm:$0xff]
    %v23 = vld [vmem:[%s1 + $0x18] sm:$0xff]
    %v24 = vld [vmem:[%s1 + $0x20] sm:$0xff]
    %v25 = vld [vmem:[%s1 + $0x28] sm:$0xff]
    %v26 = vld [vmem:[%s1 + $0x30] sm:$0xff]
    %v27 = vld [vmem:[%s1 + $0x38] sm:$0xff]
    %v28 = vld [vmem:[%s1 + $0x40] sm:$0xff]
    %v29 = vld [vmem:[%s1 + $0x48] sm:$0xff]
    %v30 = vld [vmem:[%s1 + $0x50] sm:$0xff]
    %v31 = vld [vmem:[%s1 + $0x58] sm:$0xff]
    %v32 = vld [vmem:[%s1 + $0x60] sm:$0xff]
    %v33 = vld [vmem:[%s1 + $0x68] sm:$0xff]
    %v34 = vld [vmem:[%s1 + $0x70] sm:$0xff]
    %v35 = vld [vmem:[%s1 + $0x78] sm:$0xff]
    %v36 = vld [vmem:[%s1 + $0x80] sm:$0xff]
    %v37 = vld [vmem:[%s1 + $0x88] sm:$0xff]
    %v38 = vld [vmem:[%s1 + $0x90] sm:$0xff]
    %v39 = vld [vmem:[%s1 + $0x98] sm:$0xff]
    %v40 = vld [vmem:[%s1 + $0xa0] sm:$0xff]
    %v41 = vld [vmem:[%s1 + $0xa8] sm:$0xff]
    %v42 = vld [vmem:[%s1 + $0xb0] sm:$0xff]
    %v43 = vld [vmem:[%s1 + $0xb8] sm:$0xff]
    %v44 = vld [vmem:[%s1 + $0xc0] sm:$0xff]
    %v45 = vld [vmem:[%s1 + $0xc8] sm:$0xff]
    %v46 = vld [vmem:[%s1 + $0xd0] sm:$0xff]
    %v47 = vld [vmem:[%s1 + $0xd8] sm:$0xff]
    %v48 = vld [vmem:[%s1 + $0xe0] sm:$0xff]
    %v49 = vld [vmem:[%s1 + $0xe8] sm:$0xff]
    %v50 = vld [vmem:[%s1 + $0xf0] sm:$0xff]
    %v51 = vld [vmem:[%s1 + $0xf8] sm:$0xff]
    %v52 = vld [vmem:[%s1 + $0x100] sm:$0xff]
    %v53 = vld [vmem:[%s1 + $0x108] sm:$0xff]
    %v54 = vld [vmem:[%s1 + $0x110] sm:$0xff]
    %v55 = vld [vmem:[%s1 + $0x118] sm:$0xff]
    %v56 = vld [vmem:[%s1 + $0x120] sm:$0xff]
    %v57 = vld [vmem:[%s1 + $0x128] sm:$0xff]
    %v58 = vld [vmem:[%s1 + $0x130] sm:$0xff]
    %v59 = vld [vmem:[%s1 + $0x138] sm:$0xff]
    %v60 = vld [vmem:[%s1 + $0x140] sm:$0xff]
    %v61 = vld [vmem:[%s1 + $0x148] sm:$0xff]
    %v62 = vld [vmem:[%s1 + $0x150] sm:$0xff]
    %v63 = vld [vmem:[%s1 + $0x158] sm:$0xff]
    %v64 = vld [vmem:[%s1 + $0x160] sm:$0xff]
    %v65 = vld [vmem:[%s1 + $0x168] sm:$0xff]
    %v66 = vld [vmem:[%s1 + $0x170] sm:$0xff]
    %v67 = vld [vmem:[%s1 + $0x178] sm:$0xff]
    %v68 = vld [vmem:[%s2] sm:$0x3]
    %v70 = vlaneseq
    %v71 = vshrl.u32 %v70, 7
    %v72 = vsub.s32 0, %v71
    %v73 = vrot.slane %v68, %v72
    %v74 = vlaneseq
    %v75 = vshrl.u32 %v74, 7
    %v76 = vsub.s32 1, %v75
    %v77 = vrot.slane %v68, %v76
    %vm80 = vcmask 523264
    %v82 = vsel %vm80, %v19, 0
    %84 = vmatprep.subr.mxu0 %v21
    %85 = vmatpush1.msra.mxu0 %v20
    %86 = vmatprep.subr.mxu0 %v23
    %87 = vmatpush1.msra.mxu0 %v22
    %88 = vmatprep.subr.mxu0 %v25
    %89 = vmatpush1.msra.mxu0 %v24
    %90 = vmatprep.subr.mxu0 %v27
    %91 = vmatpush1.msra.mxu0 %v26
    %92 = vmatprep.subr.mxu0 %v29
    %93 = vmatpush1.msra.mxu0 %v28
    %94 = vmatprep.subr.mxu0 %v31
    %95 = vmatpush1.msra.mxu0 %v30
    %96 = vmatprep.subr.mxu0 %v33
    %97 = vmatpush1.msra.mxu0 %v32
    %98 = vmatprep.subr.mxu0 %v35
    %99 = vmatpush1.msra.mxu0 %v34
    %100 = vmatprep.subr.mxu0 %v37
    %101 = vmatpush1.msra.mxu0 %v36
    %102 = vmatprep.subr.mxu0 %v39
    %103 = vmatpush1.msra.mxu0 %v38
    %104 = vmatprep.subr.mxu0 %v41
    %105 = vmatpush1.msra.mxu0 %v40
    %106 = vmatprep.subr.mxu0 %v43
    %107 = vmatpush1.msra.mxu0 %v42
    %108 = vmatprep.subr.mxu0 %v45
    %109 = vmatpush1.msra.mxu0 %v44
    %110 = vmatprep.subr.mxu0 %v47
    %111 = vmatpush1.msra.mxu0 %v46
    %112 = vmatprep.subr.mxu0 %v49
    %113 = vmatpush1.msra.mxu0 %v48
    %114 = vmatprep.subr.mxu0 %v51
    %115 = vmatpush1.msra.mxu0 %v50
    %116 = vmatprep.subr.mxu0 %v53
    %117 = vmatpush1.msra.mxu0 %v52
    %118 = vmatprep.subr.mxu0 %v55
    %119 = vmatpush1.msra.mxu0 %v54
    %120 = vmatprep.subr.mxu0 %v57
    %121 = vmatpush1.msra.mxu0 %v56
    %122 = vmatprep.subr.mxu0 %v59
    %123 = vmatpush1.msra.mxu0 %v58
    %124 = vmatprep.subr.mxu0 %v61
    %125 = vmatpush1.msra.mxu0 %v60
    %126 = vmatprep.subr.mxu0 %v63
    %127 = vmatpush1.msra.mxu0 %v62
    %128 = vmatprep.subr.mxu0 %v65
    %129 = vmatpush1.msra.mxu0 %v64
    %130 = vmatprep.subr.mxu0 %v67
    %131 = vmatpush1.msra.mxu0 %v66
    %132 = vmatprep.subr.mxu0 0.0
    %133 = vmatpush1.msra.mxu0 0.0
    %134 = vmatprep.subr.mxu0 0.0
    %135 = vmatpush1.msra.mxu0 0.0
    %136 = vmatprep.subr.mxu0 0.0
    %137 = vmatpush1.msra.mxu0 0.0
    %138 = vmatprep.subr.mxu0 0.0
    %139 = vmatpush1.msra.mxu0 0.0
    %140 = vmatprep.subr.mxu0 0.0
    %141 = vmatpush1.msra.mxu0 0.0
    %142 = vmatprep.subr.mxu0 0.0
    %143 = vmatpush1.msra.mxu0 0.0
    %144 = vmatprep.subr.mxu0 0.0
    %145 = vmatpush1.msra.mxu0 0.0
    %146 = vmatprep.subr.mxu0 0.0
    %147 = vmatpush1.msra.mxu0 0.0
    %148 = vmatprep.mubr.f32.mxu0 %v82
    %149 = vmatmul.mubr.f32.gmra.mrb[0].mxu0 %v18
    %v150 = vpop.f32.mrb[0].mxu0
    %v151 = vadd.f32 %v73, %v150
    %v152 = vpop.f32.mrb[0].mxu0
    %v153 = vadd.f32 %v77, %v152
    %154 = vdwg.mxu0
    %155 = vst [vmem:[#allocation2] sm:$0xff] %v151
    %vm156 = vcmask 121856
    %157 = vst.msk [vmem:[#allocation4] sm:$0xff] %vm156, %v153
    // Predicated region
    $region14: #{tpu_custom_call.1} parent=1 // pred_check
      _
    $region15: #{tpu_custom_call.1} parent=1 // pred_check_branch
      %159 = sbr.rel (0) target = $region17
    $region16: #{tpu_custom_call.1} parent=1 // pred_region
      %s161 = ssub.s32 128, 128
      %162 = vsyncadd [#allocation3], %s161
      %s164 = sshll.u32 [#allocation2], 4
      %s165 = int_to_ptr.vmem [resolvable:$true] %s164
      %167 = dma.vmem_to_hbm [thread:$0]  %s165, 128, %s3, [#allocation3]
    $region17: #{tpu_custom_call.1} parent=1 // pred_fallthru
      _
    // Predicated region
    $region18: #{tpu_custom_call.1} parent=1 // pred_check
      _
    $region19: #{tpu_custom_call.1} parent=1 // pred_check_branch
      %169 = sbr.rel (0) target = $region21
    $region20: #{tpu_custom_call.1} parent=1 // pred_region
      %s171 = ssub.s32 128, 128
      %172 = vsyncadd [#allocation5], %s171
      %s174 = sshll.u32 [#allocation4], 4
      %s175 = int_to_ptr.vmem [resolvable:$true] %s174
      %177 = dma.vmem_to_hbm [thread:$0]  %s175, 128, %s4, [#allocation5]
    $region21: #{tpu_custom_call.1} parent=1 // pred_fallthru
      _
    // Predicated region
    $region22: #{tpu_custom_call.1} parent=1 // pred_check
      _
    $region23: #{tpu_custom_call.1} parent=1 // pred_check_branch
      %179 = sbr.rel (0) target = $region25
    $region24: #{tpu_custom_call.1} parent=1 // pred_region
      %180 = dma.done [#allocation3], 128
    $region25: #{tpu_custom_call.1} parent=1 // pred_fallthru
      _
    // Predicated region
    $region26: #{tpu_custom_call.1} parent=1 // pred_check
      _
    $region27: #{tpu_custom_call.1} parent=1 // pred_check_branch
      %182 = sbr.rel (0) target = $region29
    $region28: #{tpu_custom_call.1} parent=1 // pred_region
      %183 = dma.done [#allocation5], 128
    $region29: #{tpu_custom_call.1} parent=1 // pred_fallthru
      _
    %184 = vsyncpa [#allocation3], 1
    %185 = vsyncpa [#allocation5], 1

</llo_original>
